<compile_context>
chip_gen: v6e
topology: v6e:2x2x1
jax: 0.10.0
libtpu: 0.0.40
codegen_flags: <defaults>
</compile_context>

<pallas_src>
import functools

import jax
import jax.numpy as jnp
from jax import lax
from jax.experimental import pallas as pl
from jax.experimental.pallas import tpu as pltpu


def _round_up(x, m):
    return ((x + m - 1) // m) * m


def _nst_kernel(s_ref, t_ref, o_ref, g_ref, *, n_chan, inv_denom, stacked):
    C = n_chan
    d = pl.program_id(1)

    @pl.when(d == 0)
    def _():
        g_ref[...] = jnp.zeros_like(g_ref)

    s = s_ref[0]                      # (C, TILE_D), native dtype
    t = t_ref[0]                      # (C, TILE_D), native dtype

    # Contract last dim of both operands directly (no materialized transpose).
    dn = (((1,), (1,)), ((), ()))

    if stacked:
        # Small C: one (2C, 2C) gram fills the MXU better than 3 tiny matmuls.
        u = jnp.concatenate([s, t], axis=0)                     # (2C, TILE_D)
        g_ref[...] += lax.dot_general(u, u, dn,
                                      preferred_element_type=jnp.float32)
    else:
        # Large C: three grams written into quadrants of the same scratch
        # (avoids the 33% extra FLOPs of the stacked gram).
        g_ref[:C, :C] += lax.dot_general(s, s, dn,
                                         preferred_element_type=jnp.float32)
        g_ref[C:, C:] += lax.dot_general(t, t, dn,
                                         preferred_element_type=jnp.float32)
        g_ref[:C, C:] += lax.dot_general(s, t, dn,
                                         preferred_element_type=jnp.float32)

    @pl.when(d == pl.num_programs(1) - 1)
    def _():
        eps2 = jnp.float32(1e-24)     # (F.normalize eps = 1e-12) squared
        g = g_ref[...]                # (2C, 2C) raw gram, f32

        # Diagonal = squared row norms; extract as a column and a row
        # (two masked reductions, no transpose).
        ii = lax.broadcasted_iota(jnp.int32, g.shape, 0)
        jj = lax.broadcasted_iota(jnp.int32, g.shape, 1)
        diag_m = jnp.where(ii == jj, g, jnp.float32(0.0))
        diag_col = jnp.sum(diag_m, axis=1, keepdims=True)       # (2C, 1)
        diag_row = jnp.sum(diag_m, axis=0, keepdims=True)       # (1, 2C)

        # 1 / max(||x||, eps) == rsqrt(max(||x||^2, eps^2)); rsqrt -> EUP.
        r_col = lax.rsqrt(jnp.maximum(diag_col, eps2))
        r_row = lax.rsqrt(jnp.maximum(diag_row, eps2))

        gn = g * r_col * r_row        # normalized gram
        g2 = gn * gn

        ss = jnp.sum(g2[:C, :C])
        tt = jnp.sum(g2[C:, C:])
        st = jnp.sum(g2[:C, C:])

        contrib = (tt + ss - jnp.float32(2.0) * st) * jnp.float32(inv_denom)
        o_ref[...] = jnp.broadcast_to(contrib, o_ref.shape)


def nst_loss(fm_s, fm_t):
    """fm_s, fm_t: (B, C, H, W) arrays. Returns scalar f32 NST loss."""
    B, C, H, W = fm_s.shape
    assert fm_t.shape == fm_s.shape
    D = H * W

    s = fm_s.reshape(B, C, D)
    t = fm_t.reshape(B, C, D)

    # Lane-dense D: pad to a multiple of 128 (zeros do not change dot
    # products or norms), and tile D at <= 1024 to bound per-step VMEM.
    max_tile_d = 1024
    if D <= max_tile_d:
        tile_d = _round_up(D, 128)
        d_pad = tile_d
    else:
        tile_d = max_tile_d
        d_pad = _round_up(D, tile_d)
    if d_pad != D:
        pad = [(0, 0), (0, 0), (0, d_pad - D)]
        s = jnp.pad(s, pad)
        t = jnp.pad(t, pad)
    num_d = d_pad // tile_d

    stacked = (2 * C) <= 256          # single stacked gram when C is small
    inv_denom = 1.0 / float(B * C * C)

    kernel = functools.partial(_nst_kernel, n_chan=C, inv_denom=inv_denom,
                               stacked=stacked)

    out = pl.pallas_call(
        kernel,
        out_shape=jax.ShapeDtypeStruct((B, 1, 128), jnp.float32),
        grid_spec=pltpu.PrefetchScalarGridSpec(
            num_scalar_prefetch=0,
            grid=(B, num_d),
            in_specs=[
                pl.BlockSpec((1, C, tile_d), lambda b, d: (b, 0, d)),
                pl.BlockSpec((1, C, tile_d), lambda b, d: (b, 0, d)),
            ],
            out_specs=pl.BlockSpec((1, 1, 128), lambda b, d: (b, 0, 0)),
            scratch_shapes=[pltpu.VMEM((2 * C, 2 * C), jnp.float32)],
        ),
        compiler_params=pltpu.CompilerParams(
            dimension_semantics=("parallel", "arbitrary"),
            vmem_limit_bytes=48 * 1024 * 1024,
        ),
    )(s, t)

    # Final mean over batch partials (each already carries 1/(B*C*C)).
    return jnp.sum(out[:, 0, 0])


def nst_loss_ref(fm_s, fm_t):
    """Pure-JAX reference mirroring the PyTorch forward."""
    B, C = fm_s.shape[0], fm_s.shape[1]
    s = fm_s.reshape(B, C, -1).astype(jnp.float32)
    t = fm_t.reshape(B, C, -1).astype(jnp.float32)
    eps = 1e-12
    s = s / jnp.maximum(jnp.linalg.norm(s, axis=2, keepdims=True), eps)
    t = t / jnp.maximum(jnp.linalg.norm(t, axis=2, keepdims=True), eps)

    def poly(f1, f2):
        g = jnp.einsum('bik,bjk->bij', f2, f1,
                       precision=jax.lax.Precision.HIGHEST)
        return g ** 2

    return poly(t, t).mean() + poly(s, s).mean() - 2.0 * poly(s, t).mean()


if __name__ == "__main__":
    key = jax.random.PRNGKey(0)

    # (B, C, H, W): exercises stacked path, split-gram path, and D tiling.
    cases = [
        (2, 4, 16, 16),    # small C -> stacked gram, single D tile
        (2, 256, 8, 8),    # large C -> quadrant grams, D padded 64 -> 128
        (2, 8, 40, 40),    # D = 1600 -> padded to 2048, 2 D tiles
    ]
    for idx, (B, C, H, W) in enumerate(cases):
        k1, k2 = jax.random.split(jax.random.fold_in(key, idx))
        fm_s = jax.random.normal(k1, (B, C, H, W), dtype=jnp.float32)
        fm_t = jax.random.normal(k2, (B, C, H, W), dtype=jnp.float32)

        loss = jax.block_until_ready(nst_loss(fm_s, fm_t))
        ref = jax.block_until_ready(nst_loss_ref(fm_s, fm_t))
        assert jnp.allclose(loss, ref, rtol=1e-4, atol=1e-5), (idx, loss, ref)

    print("KERNEL_OK")
</pallas_src>

<mosaic_0001>
module attributes {stable_mosaic.version = 11 : i64} {
  func.func @_nst_kernel(%arg0: i32, %arg1: i32, %arg2: memref<1x4x256xf32, #tpu.memory_space<vmem>>, %arg3: memref<1x4x256xf32, #tpu.memory_space<vmem>>, %arg4: memref<1x1x128xf32, #tpu.memory_space<vmem>>, %arg5: memref<8x8xf32, #tpu.memory_space<vmem>>) attributes {dimension_semantics = [#tpu.dimension_semantics<parallel>, #tpu.dimension_semantics<arbitrary>], iteration_bounds = array<i64: 2, 1>, scalar_prefetch = 0 : i64, scratch_operands = 1 : i64, tpu.core_type = #tpu.core_type<tc>, window_params = [{transform_indices = @transform_0, window_bounds = array<i64: 1, 4, 256>}, {transform_indices = @transform_1, window_bounds = array<i64: 1, 4, 256>}, {transform_indices = @transform_2, window_bounds = array<i64: 1, 1, 128>}]} {
    %c0_i32 = arith.constant 0 : i32
    %0 = arith.cmpi eq, %arg1, %c0_i32 : i32
    %1 = arith.extui %0 : i1 to i32
    %c0_i32_0 = arith.constant 0 : i32
    %2 = arith.cmpi ne, %1, %c0_i32_0 : i32
    scf.if %2 {
      %cst_12 = arith.constant 0.000000e+00 : f32
      %15 = vector.broadcast %cst_12 : f32 to vector<8x8xf32>
      %c0_13 = arith.constant 0 : index
      %c0_14 = arith.constant 0 : index
      %16 = vector.load %arg5[%c0_13, %c0_14] : memref<8x8xf32, #tpu.memory_space<vmem>>, vector<8x8xf32>
      tpu.vector_store %arg5[%c0_13, %c0_14], %15 {strides = array<i32>} : memref<8x8xf32, #tpu.memory_space<vmem>>, vector<8x8xf32>,
    } else {
    }
    %c0 = arith.constant 0 : index
    %c0_1 = arith.constant 0 : index
    %c0_2 = arith.constant 0 : index
    %3 = vector.load %arg2[%c0, %c0_1, %c0_2] : memref<1x4x256xf32, #tpu.memory_space<vmem>>, vector<1x4x256xf32>
    %4 = vector.shape_cast %3 : vector<1x4x256xf32> to vector<4x256xf32>
    %c0_3 = arith.constant 0 : index
    %c0_4 = arith.constant 0 : index
    %c0_5 = arith.constant 0 : index
    %5 = vector.load %arg3[%c0_3, %c0_4, %c0_5] : memref<1x4x256xf32, #tpu.memory_space<vmem>>, vector<1x4x256xf32>
    %6 = vector.shape_cast %5 : vector<1x4x256xf32> to vector<4x256xf32>
    %7 = tpu.concatenate %4, %6 in 0 : vector<4x256xf32>, vector<4x256xf32> -> vector<8x256xf32>
    %c0_6 = arith.constant 0 : index
    %c0_7 = arith.constant 0 : index
    %8 = vector.load %arg5[%c0_6, %c0_7] : memref<8x8xf32, #tpu.memory_space<vmem>>, vector<8x8xf32>
    %cst = arith.constant dense<0.000000e+00> : vector<8x8xf32>
    %9 = tpu.matmul %7, %7, %cst {dimension_numbers = #tpu.dot_dimension_numbers<[1], [1], [0], [0], [0, 0, 1, 0], [], []>} : vector<8x256xf32>, vector<8x256xf32>, vector<8x8xf32> -> vector<8x8xf32>
    %10 = arith.addf %8, %9 : vector<8x8xf32>
    %c0_8 = arith.constant 0 : index
    %c0_9 = arith.constant 0 : index
    %11 = vector.load %arg5[%c0_8, %c0_9] : memref<8x8xf32, #tpu.memory_space<vmem>>, vector<8x8xf32>
    tpu.vector_store %arg5[%c0_8, %c0_9], %10 {strides = array<i32>} : memref<8x8xf32, #tpu.memory_space<vmem>>, vector<8x8xf32>,
    %c0_i32_10 = arith.constant 0 : i32
    %12 = arith.cmpi eq, %arg1, %c0_i32_10 : i32
    %13 = arith.extui %12 : i1 to i32
    %c0_i32_11 = arith.constant 0 : i32
    %14 = arith.cmpi ne, %13, %c0_i32_11 : i32
    scf.if %14 {
      %c0_12 = arith.constant 0 : index
      %c0_13 = arith.constant 0 : index
      %15 = vector.load %arg5[%c0_12, %c0_13] : memref<8x8xf32, #tpu.memory_space<vmem>>, vector<8x8xf32>
      %16 = tpu.iota {dimensions = array<i32: 0>} : vector<8x8xi32>
      %17 = tpu.iota {dimensions = array<i32: 1>} : vector<8x8xi32>
      %18 = arith.cmpi eq, %16, %17 : vector<8x8xi32>
      %cst_14 = arith.constant 0.000000e+00 : f32
      %19 = vector.broadcast %cst_14 : f32 to vector<8x8xf32>
      %20 = arith.select %18, %15, %19 : vector<8x8xi1>, vector<8x8xf32>
      %cst_15 = arith.constant dense<0.000000e+00> : vector<8xf32>
      %21 = vector.multi_reduction <add>, %20, %cst_15 [1] : vector<8x8xf32> to vector<8xf32>
      %22 = vector.shape_cast %21 : vector<8xf32> to vector<8x1xf32>
      %cst_16 = arith.constant dense<0.000000e+00> : vector<8xf32>
      %23 = vector.multi_reduction <add>, %20, %cst_16 [0] : vector<8x8xf32> to vector<8xf32>
      %24 = vector.shape_cast %23 : vector<8xf32> to vector<1x8xf32>
      %cst_17 = arith.constant 1.000000e-24 : f32
      %25 = vector.broadcast %cst_17 : f32 to vector<8x1xf32>
      %26 = arith.maximumf %22, %25 : vector<8x1xf32>
      %27 = math.rsqrt %26 : vector<8x1xf32>
      %cst_18 = arith.constant 1.000000e-24 : f32
      %28 = vector.broadcast %cst_18 : f32 to vector<1x8xf32>
      %29 = arith.maximumf %24, %28 : vector<1x8xf32>
      %30 = math.rsqrt %29 : vector<1x8xf32>
      %31 = vector.broadcast %27 : vector<8x1xf32> to vector<8x8xf32>
      %32 = arith.mulf %15, %31 : vector<8x8xf32>
      %33 = vector.broadcast %30 : vector<1x8xf32> to vector<8x8xf32>
      %34 = arith.mulf %32, %33 : vector<8x8xf32>
      %35 = arith.mulf %34, %34 : vector<8x8xf32>
      %36 = vector.extract_strided_slice %35 {offsets = [0, 0], sizes = [4, 4], strides = [1, 1]} : vector<8x8xf32> to vector<4x4xf32>
      %37 = vector.shape_cast %36 : vector<4x4xf32> to vector<1x4x4xf32>
      %cst_19 = arith.constant dense<0.000000e+00> : vector<1xf32>
      %38 = vector.multi_reduction <add>, %37, %cst_19 [1, 2] : vector<1x4x4xf32> to vector<1xf32>
      %39 = vector.shape_cast %38 : vector<1xf32> to vector<1x1x1xf32>
      %40 = vector.extract %39[0, 0, 0] : f32 from vector<1x1x1xf32>
      %41 = vector.extract_strided_slice %35 {offsets = [4, 4], sizes = [4, 4], strides = [1, 1]} : vector<8x8xf32> to vector<4x4xf32>
      %42 = vector.shape_cast %41 : vector<4x4xf32> to vector<1x4x4xf32>
      %cst_20 = arith.constant dense<0.000000e+00> : vector<1xf32>
      %43 = vector.multi_reduction <add>, %42, %cst_20 [1, 2] : vector<1x4x4xf32> to vector<1xf32>
      %44 = vector.shape_cast %43 : vector<1xf32> to vector<1x1x1xf32>
      %45 = vector.extract %44[0, 0, 0] : f32 from vector<1x1x1xf32>
      %46 = vector.extract_strided_slice %35 {offsets = [0, 4], sizes = [4, 4], strides = [1, 1]} : vector<8x8xf32> to vector<4x4xf32>
      %47 = vector.shape_cast %46 : vector<4x4xf32> to vector<1x4x4xf32>
      %cst_21 = arith.constant dense<0.000000e+00> : vector<1xf32>
      %48 = vector.multi_reduction <add>, %47, %cst_21 [1, 2] : vector<1x4x4xf32> to vector<1xf32>
      %49 = vector.shape_cast %48 : vector<1xf32> to vector<1x1x1xf32>
      %50 = vector.extract %49[0, 0, 0] : f32 from vector<1x1x1xf32>
      %51 = arith.addf %45, %40 : f32
      %cst_22 = arith.constant 2.000000e+00 : f32
      %52 = arith.mulf %cst_22, %50 : f32
      %53 = arith.subf %51, %52 : f32
      %cst_23 = arith.constant 3.125000e-02 : f32
      %54 = arith.mulf %53, %cst_23 : f32
      %55 = vector.broadcast %54 : f32 to vector<1x1x128xf32>
      %c0_24 = arith.constant 0 : index
      %c0_25 = arith.constant 0 : index
      %c0_26 = arith.constant 0 : index
      %56 = vector.load %arg4[%c0_24, %c0_25, %c0_26] : memref<1x1x128xf32, #tpu.memory_space<vmem>>, vector<1x1x128xf32>
      tpu.vector_store %arg4[%c0_24, %c0_25, %c0_26], %55 {strides = array<i32>} : memref<1x1x128xf32, #tpu.memory_space<vmem>>, vector<1x1x128xf32>,
    } else {
    }
    return
  }
  func.func @transform_0(%arg0: i32, %arg1: i32) -> (i32, i32, i32) {
    %c0_i32 = arith.constant 0 : i32
    %c0_i32_0 = arith.constant 0 : i32
    return %arg0, %c0_i32, %arg1 : i32, i32, i32
  }
  func.func @transform_1(%arg0: i32, %arg1: i32) -> (i32, i32, i32) {
    %c0_i32 = arith.constant 0 : i32
    %c0_i32_0 = arith.constant 0 : i32
    return %arg0, %c0_i32, %arg1 : i32, i32, i32
  }
  func.func @transform_2(%arg0: i32, %arg1: i32) -> (i32, i32, i32) {
    %c0_i32 = arith.constant 0 : i32
    %c0_i32_0 = arith.constant 0 : i32
    %c0_i32_1 = arith.constant 0 : i32
    return %arg0, %c0_i32, %c0_i32_0 : i32, i32, i32
  }
}

</mosaic_0001>

<llo_original>
// kernel: tpu_custom_call.1
$region0: #{tpu_custom_call.1}
  #allocation0 [shape = 'u32[]', space=smem, size = 0x4, offset = 0x4, fixed_abs, tag = 'smem constant byte address 0x4 - core index']
  #allocation1 [shape = 'u32[144,128]{1,0:T(1,128)}', space=vmem, size = 0x12000, scoped, tag = 'internal scratch']
  #allocation2 [shape = 'f32[8,8]{1,0:T(8,128)}', space=vmem, size = 0x1000, scoped, tag = 'scratch operand']
  %s0 = inlined_call_operand.hbm [shape: f32[2,4,256], index: 0, kind: input, shape index: {}]
  %s1 = inlined_call_operand.hbm [shape: f32[2,4,256], index: 1, kind: input, shape index: {}]
  %s2 = inlined_call_operand.hbm [shape: f32[2,1,128], index: 2, kind: output, shape index: {}]
  %s3 = sld [smem:[#allocation0]]
  $region57: #{tpu_custom_call.1} parent=0
    _
  %s5 = ssub.s32 1, %s3
  %s6 = scalar_select 0, %s5, %s3
  $region1: #{tpu_custom_call.1} parent=0
    #allocation3 [shape = 'u8[8192]{0}', space=vmem, size = 0x2000, scoped, tag = 'input window, operand 0']
    #allocation4 [shape = 's32[2]{0}', space=sflag, size = 0x8, scoped, tag = 'scoped memory for tpu_custom_call.1']
    #allocation5 [shape = 's32[2]{0}', space=sflag, size = 0x8, scoped, tag = 'scoped memory for tpu_custom_call.1']
    #allocation6 [shape = 'u8[8192]{0}', space=vmem, size = 0x2000, scoped, tag = 'input window, operand 1']
    #allocation7 [shape = 's32[2]{0}', space=sflag, size = 0x8, scoped, tag = 'scoped memory for tpu_custom_call.1']
    #allocation8 [shape = 'u8[1024]{0}', space=vmem, size = 0x400, scoped, tag = 'output window, operand 0']
    %7 = vsyncpa [#allocation4], 0
    %s8 = scalar_lea.sflag [#allocation4], 1
    %9 = vsyncpa %s8, 0
    %10 = vsyncpa [#allocation7], 0
    %s11 = scalar_lea.sflag [#allocation7], 1
    %12 = vsyncpa %s11, 0
    %13 = vsyncpa [#allocation5], 0
    %s14 = scalar_lea.sflag [#allocation5], 1
    %15 = vsyncpa %s14, 0
    loop: start=0, step=1, limit=4
    $region2: #{tpu_custom_call.1} parent=1 // loop_pre_header
      _
    $region3: #{tpu_custom_call.1} parent=1 // loop_header
      %s17 = sphi 0, %s21
      %p18 = scmp.ge.s32.totalorder %s17, 4
      %s24 = sphi 0, %s36
      %s25 = sphi 0, %s32
      %s26 = sphi 0, %s24
      %s27 = sphi 0, %s25
      %s28 = sphi 0, %s26
      %s29 = sphi 0, %s27
      %s41 = sphi 0, %s43
      %s44 = sphi 0, %s41
      %s45 = sphi 0, %s44
      %s61 = sphi 0, %s45
      %s69 = sphi 0, %s71
      %s72 = sphi 0, %s69
      %s73 = sphi 0, %s72
      %s89 = sphi 0, %s73
      %s95 = sphi 0, %s97
      %s98 = sphi 0, %s95
      %s99 = sphi 0, %s98
      %s115 = sphi 0, %s99
    $region4: #{tpu_custom_call.1} parent=1 // loop_header_branch
      %20 = sbr.rel (%p18) target = $region8
    $region5: #{tpu_custom_call.1} parent=1 // loop_body
      %s22 = ssub.s32 %s17, 1
      %s23 = ssub.s32 %s17, 2
      %s30 = sadd.s32 1, %s25
      %p31 = scmp.ge.s32.totalorder %s30, 1
      %s32 = scalar_select %p31, 0, %s30
      %s33 = sadd.s32 1, %s24
      %s34 = scalar_select %p31, %s33, %s24
      %p35 = scmp.ge.s32.totalorder %s34, 2
      %s36 = scalar_select %p35, 0, %s34
      %s37 = ssub.s32 %s24, %s36
      %s38 = ssub.s32 %s25, %s32
      %s39 = sor.u32 %s37, %s38
      %p40 = scmp.eq.s32.totalorder %s39, 0
      %s42 = sadd.s32 %s41, 1
      %s43 = scalar_select %p40, %s41, %s42
      %p46 = pneg %p40
      %p47 = scmp.eq.s32.totalorder %s17, 1
      %p48 = por %p46, %p47
      %p49 = scmp.ne.s32.totalorder %s41, %s44
      %p50 = scmp.eq.s32.totalorder %s17, 0
      %p51 = por %p49, %p50
      %p52 = scmp.ne.s32.totalorder %s41, %s44
      %p53 = scmp.eq.s32.totalorder %s22, 1
      %p54 = por %p52, %p53
      %p55 = scmp.ne.s32.totalorder %s44, %s45
      %p56 = scmp.eq.s32.totalorder %s22, 0
      %p57 = por %p55, %p56
      %p58 = scmp.ne.s32.totalorder %s44, %s45
      %p59 = scmp.eq.s32.totalorder %s23, 1
      %p60 = por %p58, %p59
      %p62 = scmp.ne.s32.totalorder %s45, %s61
      %p63 = scmp.eq.s32.totalorder %s23, 0
      %p64 = por %p62, %p63
      %s65 = ssub.s32 %s24, %s36
      %s66 = ssub.s32 %s25, %s32
      %s67 = sor.u32 %s65, %s66
      %p68 = scmp.eq.s32.totalorder %s67, 0
      %s70 = sadd.s32 %s69, 1
      %s71 = scalar_select %p68, %s69, %s70
      %p74 = pneg %p68
      %p75 = scmp.eq.s32.totalorder %s17, 1
      %p76 = por %p74, %p75
      %p77 = scmp.ne.s32.totalorder %s69, %s72
      %p78 = scmp.eq.s32.totalorder %s17, 0
      %p79 = por %p77, %p78
      %p80 = scmp.ne.s32.totalorder %s69, %s72
      %p81 = scmp.eq.s32.totalorder %s22, 1
      %p82 = por %p80, %p81
      %p83 = scmp.ne.s32.totalorder %s72, %s73
      %p84 = scmp.eq.s32.totalorder %s22, 0
      %p85 = por %p83, %p84
      %p86 = scmp.ne.s32.totalorder %s72, %s73
      %p87 = scmp.eq.s32.totalorder %s23, 1
      %p88 = por %p86, %p87
      %p90 = scmp.ne.s32.totalorder %s73, %s89
      %p91 = scmp.eq.s32.totalorder %s23, 0
      %p92 = por %p90, %p91
      %s93 = ssub.s32 %s24, %s36
      %p94 = scmp.eq.s32.totalorder %s93, 0
      %s96 = sadd.s32 %s95, 1
      %s97 = scalar_select %p94, %s95, %s96
      %p100 = pneg %p94
      %p101 = scmp.eq.s32.totalorder %s17, 1
      %p102 = por %p100, %p101
      %p103 = scmp.ne.s32.totalorder %s95, %s98
      %p104 = scmp.eq.s32.totalorder %s17, 0
      %p105 = por %p103, %p104
      %p106 = scmp.ne.s32.totalorder %s95, %s98
      %p107 = scmp.eq.s32.totalorder %s22, 1
      %p108 = por %p106, %p107
      %p109 = scmp.ne.s32.totalorder %s98, %s99
      %p110 = scmp.eq.s32.totalorder %s22, 0
      %p111 = por %p109, %p110
      %p112 = scmp.ne.s32.totalorder %s98, %s99
      %p113 = scmp.eq.s32.totalorder %s23, 1
      %p114 = por %p112, %p113
      %p116 = scmp.ne.s32.totalorder %s99, %s115
      %p117 = scmp.eq.s32.totalorder %s23, 0
      %p118 = por %p116, %p117
      %p119 = scmp.le.s32.totalorder 1, %s17
      %p120 = scmp.lt.s32.totalorder %s17, 3
      %p121 = pnand %p119, %p120
      %p122 = pneg %p121
      // Predicated region
      $region9: #{tpu_custom_call.1} parent=5 // pred_check
        _
      $region10: #{tpu_custom_call.1} parent=5 // pred_check_branch
        %124 = sbr.rel (%p121) target = $region12
      $region11: #{tpu_custom_call.1} parent=5 // pred_region
        %s125 = ssub.s32 %s17, 1
      $region12: #{tpu_custom_call.1} parent=5 // pred_fallthru
        _
      %p126 = scmp.lt.s32.totalorder %s17, 2
      // Predicated region
      $region13: #{tpu_custom_call.1} parent=5 // pred_check
        %p127 = pneg %p126
      $region14: #{tpu_custom_call.1} parent=5 // pred_check_branch
        %129 = sbr.rel (%p127) target = $region16
      $region15: #{tpu_custom_call.1} parent=5 // pred_region
        // Predicated region
        $region17: #{tpu_custom_call.1} parent=15 // pred_check
          %p130 = pneg %p51
        $region18: #{tpu_custom_call.1} parent=15 // pred_check_branch
          %132 = sbr.rel (%p130) target = $region20
        $region19: #{tpu_custom_call.1} parent=15 // pred_region
          %s133 = sand.u32 %s41, 1
          %s134 = scalar_lea.sflag [#allocation4], %s133
          %s135 = sand.u32 %s41, 1
          %s136 = smul.addr %s135, 8
          %s137 = scalar_lea.vmem [#allocation3], %s136
          %s138 = smul.u32 2, %s25
          %s140 = ssub.s32 128, 128
          %141 = vsyncadd %s134, %s140
          %s142 = smul.addr %s24, 2
          %s143 = sadd.s32 %s138, %s142
          %s144 = smul.addr %s143, 64
          %s145 = scalar_lea.hbm %s0, %s144
          %s147 = sshll.u32 %s137, 4
          %s148 = int_to_ptr.vmem [resolvable:$true] %s147
          %150 = dma.hbm_to_vmem [thread:$0]  %s145, 128, %s148, %s134
        $region20: #{tpu_custom_call.1} parent=15 // pred_fallthru
          _
        // Predicated region
        $region21: #{tpu_custom_call.1} parent=15 // pred_check
          %p151 = pneg %p79
        $region22: #{tpu_custom_call.1} parent=15 // pred_check_branch
          %153 = sbr.rel (%p151) target = $region24
        $region23: #{tpu_custom_call.1} parent=15 // pred_region
          %s154 = sand.u32 %s69, 1
          %s155 = scalar_lea.sflag [#allocation7], %s154
          %s156 = sand.u32 %s69, 1
          %s157 = smul.addr %s156, 8
          %s158 = scalar_lea.vmem [#allocation6], %s157
          %s159 = smul.u32 2, %s25
          %s161 = ssub.s32 128, 128
          %162 = vsyncadd %s155, %s161
          %s163 = smul.addr %s24, 2
          %s164 = sadd.s32 %s159, %s163
          %s165 = smul.addr %s164, 64
          %s166 = scalar_lea.hbm %s1, %s165
          %s168 = sshll.u32 %s158, 4
          %s169 = int_to_ptr.vmem [resolvable:$true] %s168
          %171 = dma.hbm_to_vmem [thread:$0]  %s166, 128, %s169, %s155
        $region24: #{tpu_custom_call.1} parent=15 // pred_fallthru
          _
      $region16: #{tpu_custom_call.1} parent=5 // pred_fallthru
        _
      %p172 = scmp.le.s32.totalorder 1, %s17
      %p173 = scmp.lt.s32.totalorder %s17, 3
      %p174 = pnand %p172, %p173
      %p175 = pneg %p174
      // Predicated region
      $region25: #{tpu_custom_call.1} parent=5 // pred_check
        _
      $region26: #{tpu_custom_call.1} parent=5 // pred_check_branch
        %177 = sbr.rel (%p174) target = $region28
      $region27: #{tpu_custom_call.1} parent=5 // pred_region
        %s178 = ssub.s32 %s17, 1
        %s179 = sand.u32 %s44, 1
        %s180 = scalar_lea.sflag [#allocation4], %s179
        %s181 = sand.u32 %s44, 1
        %s182 = smul.addr %s181, 8
        %s183 = scalar_lea.vmem [#allocation3], %s182
        // Predicated region
        $region29: #{tpu_custom_call.1} parent=27 // pred_check
          %p184 = pneg %p57
        $region30: #{tpu_custom_call.1} parent=27 // pred_check_branch
          %186 = sbr.rel (%p184) target = $region32
        $region31: #{tpu_custom_call.1} parent=27 // pred_region
          %187 = dma.done %s180, 128
        $region32: #{tpu_custom_call.1} parent=27 // pred_fallthru
          _
        %s188 = sand.u32 %s72, 1
        %s189 = scalar_lea.sflag [#allocation7], %s188
        %s190 = sand.u32 %s72, 1
        %s191 = smul.addr %s190, 8
        %s192 = scalar_lea.vmem [#allocation6], %s191
        // Predicated region
        $region33: #{tpu_custom_call.1} parent=27 // pred_check
          %p193 = pneg %p85
        $region34: #{tpu_custom_call.1} parent=27 // pred_check_branch
          %195 = sbr.rel (%p193) target = $region36
        $region35: #{tpu_custom_call.1} parent=27 // pred_region
          %196 = dma.done %s189, 128
        $region36: #{tpu_custom_call.1} parent=27 // pred_fallthru
          _
        %s197 = sand.u32 %s44, 1
        %s198 = scalar_lea.sflag [#allocation4], %s197
        %s199 = sand.u32 %s44, 1
        %s200 = smul.addr %s199, 8
        %s201 = scalar_lea.vmem [#allocation3], %s200
        %p202 = pneg %p57
        %p203 = pneg %p54
        %s204 = sand.u32 %s72, 1
        %s205 = scalar_lea.sflag [#allocation7], %s204
        %s206 = sand.u32 %s72, 1
        %s207 = smul.addr %s206, 8
        %s208 = scalar_lea.vmem [#allocation6], %s207
        %p209 = pneg %p85
        %p210 = pneg %p82
        %p211 = pneg %p111
        %p212 = pneg %p108
        %s213 = sand.u32 %s98, 1
        %s214 = scalar_lea.sflag [#allocation5], %s213
        %s215 = sand.u32 %s98, 1
        %s216 = scalar_lea.vmem [#allocation8], %s215
        %s217 = smul.u32 2, %s27
        %s218 = smul.u32 2, %s27
        %p219 = scmp.eq.s32.totalorder %s27, 0
        // Predicated region
        $region37: #{tpu_custom_call.1} parent=27 // pred_check
          %p220 = pneg %p219
        $region38: #{tpu_custom_call.1} parent=27 // pred_check_branch
          %222 = sbr.rel (%p220) target = $region40
        $region39: #{tpu_custom_call.1} parent=27 // pred_region
          %vm223 = vcmask 64512
          %224 = vst.msk [vmem:[#allocation2] sm:$0xff] %vm223, 0.0
        $region40: #{tpu_custom_call.1} parent=27 // pred_fallthru
          _
        %v225 = vld [vmem:[%s183] sm:$0xff]
        %v226 = vld [vmem:[%s192] sm:$0xff]
        %v228 = vcombine.high %v225, %v225
        %v231 = vcombine.low %v226, %v226
        %vm233 = vcmask 1043456
        %v234 = vsel %vm233, %v225, %v231
        %v235 = vsel %vm233, %v228, %v226
        %v236 = vld [vmem:[#allocation2] sm:$0xff]
        %237 = vmatprep.subr.mxu0 0.0
        %238 = vmatpush1.xpose.msra.mxu0 0.0
        %239 = vmatprep.subr.mxu0 0.0
        %240 = vmatpush1.xpose.msra.mxu0 0.0
        %241 = vmatprep.subr.mxu0 0.0
        %242 = vmatpush1.xpose.msra.mxu0 0.0
        %243 = vmatprep.subr.mxu0 0.0
        %244 = vmatpush1.xpose.msra.mxu0 0.0
        %245 = vmatprep.subr.mxu0 0.0
        %246 = vmatpush1.xpose.msra.mxu0 0.0
        %247 = vmatprep.subr.mxu0 0.0
        %248 = vmatpush1.xpose.msra.mxu0 0.0
        %249 = vmatprep.subr.mxu0 0.0
        %250 = vmatpush1.xpose.msra.mxu0 0.0
        %251 = vmatprep.subr.mxu0 0.0
        %252 = vmatpush1.xpose.msra.mxu0 0.0
        %253 = vmatprep.subr.mxu0 0.0
        %254 = vmatpush1.xpose.msra.mxu0 0.0
        %255 = vmatprep.subr.mxu0 0.0
        %256 = vmatpush1.xpose.msra.mxu0 0.0
        %257 = vmatprep.subr.mxu0 0.0
        %258 = vmatpush1.xpose.msra.mxu0 0.0
        %259 = vmatprep.subr.mxu0 0.0
        %260 = vmatpush1.xpose.msra.mxu0 0.0
        %261 = vmatprep.subr.mxu0 0.0
        %262 = vmatpush1.xpose.msra.mxu0 0.0
        %263 = vmatprep.subr.mxu0 0.0
        %264 = vmatpush1.xpose.msra.mxu0 0.0
        %265 = vmatprep.subr.mxu0 0.0
        %266 = vmatpush1.xpose.msra.mxu0 0.0
        %267 = vmatprep.subr.mxu0 %v235
        %268 = vmatpush1.xpose.msra.mxu0 %v234
        %269 = vmatprep.subr.mxu0 0.0
        %270 = vmatpush2.xpose.msra.mxu0 0.0
        %271 = vmatprep.subr.mxu0 0.0
        %272 = vmatpush2.xpose.msra.mxu0 0.0
        %273 = vmatprep.subr.mxu0 0.0
        %274 = vmatpush2.xpose.msra.mxu0 0.0
        %275 = vmatprep.subr.mxu0 0.0
        %276 = vmatpush2.xpose.msra.mxu0 0.0
        %277 = vmatprep.subr.mxu0 0.0
        %278 = vmatpush2.xpose.msra.mxu0 0.0
        %279 = vmatprep.subr.mxu0 0.0
        %280 = vmatpush2.xpose.msra.mxu0 0.0
        %281 = vmatprep.subr.mxu0 0.0
        %282 = vmatpush2.xpose.msra.mxu0 0.0
        %283 = vmatprep.subr.mxu0 0.0
        %284 = vmatpush2.xpose.msra.mxu0 0.0
        %285 = vmatprep.subr.mxu0 0.0
        %286 = vmatpush2.xpose.msra.mxu0 0.0
        %287 = vmatprep.subr.mxu0 0.0
        %288 = vmatpush2.xpose.msra.mxu0 0.0
        %289 = vmatprep.subr.mxu0 0.0
        %290 = vmatpush2.xpose.msra.mxu0 0.0
        %291 = vmatprep.subr.mxu0 0.0
        %292 = vmatpush2.xpose.msra.mxu0 0.0
        %293 = vmatprep.subr.mxu0 0.0
        %294 = vmatpush2.xpose.msra.mxu0 0.0
        %295 = vmatprep.subr.mxu0 0.0
        %296 = vmatpush2.xpose.msra.mxu0 0.0
        %297 = vmatprep.subr.mxu0 0.0
        %298 = vmatpush2.xpose.msra.mxu0 0.0
        %299 = vmatprep.subr.mxu0 0.0
        %300 = vmatpush2.xpose.msra.mxu0 0.0
        %301 = vmatprep.mubr.f32.mxu0 %v235
        %302 = vmatmul.mubr.f32.gmra.mxu0 %v234
        %v303 = vpop.f32.mrf.mxu0
        %v304 = vadd.f32 0.0, %v303
        %v305 = vpop.f32.mrf.mxu0
        %306 = vdwg.mxu0
        %v307 = vadd.f32 %v236, %v304
        %vm308 = vcmask 64512
        %309 = vst.msk [vmem:[#allocation2] sm:$0xff] %vm308, %v307
        // Predicated region
        $region41: #{tpu_custom_call.1} parent=27 // pred_check
          %p310 = pneg %p219
        $region42: #{tpu_custom_call.1} parent=27 // pred_check_branch
          %312 = sbr.rel (%p310) target = $region44
        $region43: #{tpu_custom_call.1} parent=27 // pred_region
          %v313 = vld [vmem:[#allocation2] sm:$0xff]
          %v314 = vlaneseq
          %v315 = vshrl.u32 %v314, 7
          %v316 = vlaneseq
          %v317 = vand.u32 %v316, 127
          %vm318 = vcmp.eq.s32.totalorder %v315, %v317
          %v319 = vsel %vm318, %v313, 0.0
          %v320 = vsel %vm308, %v319, 0.0
          %321 = vadd.xlane.f32.xlu0 %v320
          %v322 = vpop.xlane.xlu0 %321
          %v323 = vrot.slane %v320, 4
          %v324 = vadd.f32 %v320, %v323
          %v325 = vrot.slane %v324, 2
          %v326 = vadd.f32 %v324, %v325
          %v327 = vrot.slane %v326, 1
          %v328 = vadd.f32 %v326, %v327
          %v329 = vmax.f32 %v322, 1e-24
          %v330 = vrsqrt.pop %v329
          %v331 = vmax.f32 %v328, 1e-24
          %v332 = vrsqrt.pop %v331
          %v333 = vmul.f32 %v313, %v330
          %v334 = vmul.f32 %v333, %v332
          %v335 = vmul.f32 %v334, %v334
          %vm336 = vcmask 27648
          %v337 = vsel %vm336, %v335, 0.0
          %338 = vadd.xlane.f32.xlu0 %v337
          %v339 = vpop.xlane.xlu0 %338
          %v340 = vrot.slane %v339, 4
          %v341 = vadd.f32 %v339, %v340
          %v342 = vrot.slane %v341, 2
          %v343 = vadd.f32 %v341, %v342
          %v344 = vrot.slane %v343, 1
          %v345 = vadd.f32 %v343, %v344
          %s346 = vtos %v345
          %v348 = vrot.slane %v335, 4
          %349 = vrot.lane.b32.xlu0 %v348, 124
          %v350 = vpop.permute.xlu0 %349
          %v352 = vsel %vm336, %v350, 0.0
          %353 = vadd.xlane.f32.xlu0 %v352
          %v354 = vpop.xlane.xlu0 %353
          %v355 = vrot.slane %v354, 4
          %v356 = vadd.f32 %v354, %v355
          %v357 = vrot.slane %v356, 2
          %v358 = vadd.f32 %v356, %v357
          %v359 = vrot.slane %v358, 1
          %v360 = vadd.f32 %v358, %v359
          %s361 = vtos %v360
          %362 = vrot.lane.b32.xlu0 %v335, 124
          %v363 = vpop.permute.xlu0 %362
          %v365 = vsel %vm336, %v363, 0.0
          %366 = vadd.xlane.f32.xlu0 %v365
          %v367 = vpop.xlane.xlu0 %366
          %v368 = vrot.slane %v367, 4
          %v369 = vadd.f32 %v367, %v368
          %v370 = vrot.slane %v369, 2
          %v371 = vadd.f32 %v369, %v370
          %v372 = vrot.slane %v371, 1
          %v373 = vadd.f32 %v371, %v372
          %s374 = vtos %v373
          %s375 = sadd.f32 %s361, %s346
          %s376 = smul.f32 %s374, 2.0
          %s377 = ssub.f32 %s375, %s376
          %s378 = smul.f32 %s377, 0.03125
          %v379 = vstv %s378
          %380 = vst [vmem:[%s216] sm:$0x1] %v379
        $region44: #{tpu_custom_call.1} parent=27 // pred_fallthru
          _
        %s381 = sand.u32 %s98, 1
        %s382 = scalar_lea.sflag [#allocation5], %s381
        %s383 = sand.u32 %s98, 1
        %s384 = scalar_lea.vmem [#allocation8], %s383
        // Predicated region
        $region45: #{tpu_custom_call.1} parent=27 // pred_check
          %p385 = pneg %p108
        $region46: #{tpu_custom_call.1} parent=27 // pred_check_branch
          %387 = sbr.rel (%p385) target = $region48
        $region47: #{tpu_custom_call.1} parent=27 // pred_region
          %s389 = ssub.s32 16, 16
          %390 = vsyncadd %s382, %s389
          %s391 = smul.addr %s26, 16
          %s392 = scalar_lea.hbm %s2, %s391
          %s394 = sshll.u32 %s384, 4
          %s395 = int_to_ptr.vmem [resolvable:$true] %s394
          %397 = dma.vmem_to_hbm [thread:$0]  %s395, 16, %s392, %s382
        $region48: #{tpu_custom_call.1} parent=27 // pred_fallthru
          _
      $region28: #{tpu_custom_call.1} parent=5 // pred_fallthru
        _
      %p398 = scmp.le.s32.totalorder 2, %s17
      // Predicated region
      $region49: #{tpu_custom_call.1} parent=5 // pred_check
        %p399 = pneg %p398
      $region50: #{tpu_custom_call.1} parent=5 // pred_check_branch
        %401 = sbr.rel (%p399) target = $region52
      $region51: #{tpu_custom_call.1} parent=5 // pred_region
        %s402 = ssub.s32 %s17, 2
        // Predicated region
        $region53: #{tpu_custom_call.1} parent=51 // pred_check
          %p403 = pneg %p114
        $region54: #{tpu_custom_call.1} parent=51 // pred_check_branch
          %405 = sbr.rel (%p403) target = $region56
        $region55: #{tpu_custom_call.1} parent=51 // pred_region
          %s406 = sand.u32 %s99, 1
          %s407 = scalar_lea.sflag [#allocation5], %s406
          %s408 = sand.u32 %s99, 1
          %s409 = scalar_lea.vmem [#allocation8], %s408
          %410 = dma.done %s407, 16
        $region56: #{tpu_custom_call.1} parent=51 // pred_fallthru
          _
      $region52: #{tpu_custom_call.1} parent=5 // pred_fallthru
        _
    $region6: #{tpu_custom_call.1} parent=1 // loop_footer
      %s21 = sadd.s32 1, %s17
    $region7: #{tpu_custom_call.1} parent=1 // loop_footer_branch
      %16 = sbr.rel target = $region3
    $region8: #{tpu_custom_call.1} parent=1 // loop_exit
      _
    %411 = vsyncpa [#allocation4], 1
    %s412 = scalar_lea.sflag [#allocation4], 1
    %413 = vsyncpa %s412, 1
    %414 = vsyncpa [#allocation7], 1
    %s415 = scalar_lea.sflag [#allocation7], 1
    %416 = vsyncpa %s415, 1
    %417 = vsyncpa [#allocation5], 1
    %s418 = scalar_lea.sflag [#allocation5], 1
    %419 = vsyncpa %s418, 1

</llo_original>
